<compile_context>
chip_gen: v7x
topology: tpu7x:2x2x1
jax: 0.10.0
libtpu: 0.0.40
codegen_flags: <defaults>
</compile_context>

<pallas_src>
import functools
import math

import jax
import jax.numpy as jnp
from jax.experimental import pallas as pl
from jax.experimental.pallas import tpu as pltpu

# Module hyper-parameters (PyTorch __init__ defaults).
ALPHA = 0.25
GAMMA = 2.0          # gamma == 2 -> beta = (1 - pt)^2 computed as a multiply
EPS = 1e-12
IGNORE_LABEL = -1
WEIGHT = 1.0
SCALE = 1.0
FROM_LOGITS = False


@functools.lru_cache(maxsize=1)
def _vmem_capacity_bytes():
    """Physical VMEM of the local TPU; conservative fallback (v7x per-TC)."""
    try:
        return int(pltpu.get_tpu_info().vmem_capacity_bytes)
    except Exception:
        return 64 * 1024 * 1024


def _sublane_target(pred_dtype, label_dtype):
    """Sublane multiple needed for fully packed vregs on both input streams."""
    it = min(jnp.dtype(pred_dtype).itemsize, jnp.dtype(label_dtype).itemsize)
    return max(8, 32 // max(it, 1))


def _pick_fold(c, hw, sublane):
    """Smallest S folding spatial rows into sublanes so (C*S) % sublane == 0.

    Falls back to S=1 (correct, just padded vregs) when H*W is not a multiple
    of 128*S.
    """
    if c % sublane == 0:
        return 1
    s = sublane // math.gcd(c, sublane)
    if s > 1 and hw % (128 * s) == 0:
        return s
    return 1


def _pick_lane_tile(lfull, rows, elem_bytes, budget_bytes):
    """Largest lane tile (multiple of 128 dividing lfull) under the budget."""
    if rows * lfull * elem_bytes <= budget_bytes:
        return lfull
    limit = max(128, budget_bytes // (elem_bytes * rows))
    best = None
    d = 128
    while d <= lfull:
        if lfull % d == 0 and d <= limit:
            best = d
        d += 128
    if best is None:
        # TODO(synk): H*W/S has no 128-multiple divisor under the budget; fall
        # back to the full extent (vmem_limit_bytes is raised accordingly).
        return lfull
    return best


def _nfl_kernel(pred_ref, label_ref, beta_out, loss_out, sw_out,
                beta_acc, loss_acc, sw_acc):
    # pred_ref: (1, R, T) logits (native dtype); label_ref: (1, R, T) labels
    # (native dtype, read directly — no wrapper cast / extra HBM pass).
    t = pl.program_id(2)

    x = pred_ref[...].astype(jnp.float32)
    lab = label_ref[...]                          # compare in native domain

    one_hot = lab > 0
    valid = lab != IGNORE_LABEL

    p = x if FROM_LOGITS else jax.nn.sigmoid(x)
    pt = jnp.where(one_hot, p, 1.0 - p)
    pt = jnp.where(valid, pt, 1.0)

    one_minus_pt = 1.0 - pt
    if GAMMA == 2.0:
        beta = one_minus_pt * one_minus_pt
    else:
        beta = jnp.power(one_minus_pt, GAMMA)

    # Fold the sign into the alpha constants (saves one VALU op per vreg).
    neg_alpha = jnp.where(one_hot, -ALPHA, ALPHA - 1.0)
    log_term = jnp.log(jnp.minimum(pt + EPS, 1.0))
    # Where invalid: pt == 1 exactly -> beta == 0 and log_term == 0, so the
    # reference's explicit `* sample_weight` multiply is redundant here.
    loss_un = neg_alpha * beta * log_term
    sw = valid.astype(jnp.float32)

    @pl.when(t == 0)
    def _():                                       # init (no zero-fill pass)
        beta_acc[...] = beta
        loss_acc[...] = loss_un
        sw_acc[...] = sw

    @pl.when(t > 0)
    def _():                                       # pure VALU adds per step
        beta_acc[...] += beta
        loss_acc[...] += loss_un
        sw_acc[...] += sw

    @pl.when(t == pl.num_programs(2) - 1)
    def _():                                       # single lane reduce at end
        beta_out[...] = jnp.sum(beta_acc[...], axis=-1, keepdims=True)
        loss_out[...] = jnp.sum(loss_acc[...], axis=-1, keepdims=True)
        sw_out[...] = jnp.sum(sw_acc[...], axis=-1, keepdims=True)


@functools.partial(jax.jit, static_argnames=("lane_tile",))
def normalized_focal_loss_sigmoid(pred, label, lane_tile=None):
    """pred, label: (B, C, H, W). Returns per-sample loss, shape (B,)."""
    B, C, H, W = pred.shape
    HW = H * W

    # Sublane fold: (B, C, HW) -> (B, C*S, HW/S) so vregs are fully packed.
    sub = _sublane_target(pred.dtype, label.dtype)
    S = _pick_fold(C, HW, sub)
    R = C * S
    Lfull = HW // S

    # Pure reshapes (free); no dtype conversion -> no extra HBM pass.
    pred2 = pred.reshape(B, R, Lfull)
    label2 = label.reshape(B, R, Lfull)

    cap = _vmem_capacity_bytes()
    # Per-element VMEM: double-buffered pred + label, plus 3 f32 accumulators.
    elem_bytes = 2 * pred.dtype.itemsize + 2 * label.dtype.itemsize + 3 * 4
    budget = cap // 4
    T = lane_tile if lane_tile is not None else _pick_lane_tile(
        Lfull, R, elem_bytes, budget)
    assert Lfull % T == 0, (Lfull, T)
    n_tiles = Lfull // T

    # Second parallel axis so v7x's two TensorCores have work when B is small.
    P = 2 if (B < 2 and n_tiles % 2 == 0 and n_tiles >= 2) else 1
    n_inner = n_tiles // P

    vmem_needed = R * T * elem_bytes + (2 << 20)
    vmem_limit = min(int(cap * 0.9), max(cap // 2, vmem_needed))

    out_sds = jax.ShapeDtypeStruct((B * P, R, 1), jnp.float32)
    out_spec = pl.BlockSpec((1, R, 1), lambda b, p, t: (b * P + p, 0, 0))
    in_spec = pl.BlockSpec((1, R, T), lambda b, p, t: (b, 0, p * n_inner + t))

    beta_par, loss_par, sw_par = pl.pallas_call(
        _nfl_kernel,
        out_shape=(out_sds, out_sds, out_sds),
        grid_spec=pltpu.PrefetchScalarGridSpec(
            num_scalar_prefetch=0,
            grid=(B, P, n_inner),
            in_specs=[in_spec, in_spec],
            out_specs=[out_spec, out_spec, out_spec],
            scratch_shapes=[
                pltpu.VMEM((1, R, T), jnp.float32),   # Σ beta (raw), tile-wide
                pltpu.VMEM((1, R, T), jnp.float32),   # Σ un-normalized loss
                pltpu.VMEM((1, R, T), jnp.float32),   # Σ valid-pixel mask
            ],
        ),
        compiler_params=pltpu.CompilerParams(
            dimension_semantics=("parallel", "parallel", "arbitrary"),
            vmem_limit_bytes=vmem_limit,
        ),
    )(pred2, label2)

    # Tiny XLA epilogue (O(B*C) elements): regroup folded rows per channel,
    # apply the (detached) delimiter mult = H*W / (Σβ_c + eps) and
    # size_average.
    beta_ch = beta_par.reshape(B, P, C, S).sum(axis=(1, 3))     # (B, C)
    loss_ch = loss_par.reshape(B, P, C, S).sum(axis=(1, 3))     # (B, C)
    sw_b = sw_par.reshape(B, -1).sum(axis=-1)                   # (B,)
    mult = float(HW) / (beta_ch + EPS)
    total = jnp.sum(mult * loss_ch, axis=-1)
    return (SCALE * WEIGHT) * total / (sw_b + EPS)


def _reference(pred, label):
    """Pure-JAX reference mirroring the PyTorch forward (for verification)."""
    one_hot = label > 0
    p = jax.nn.sigmoid(pred)
    alpha = jnp.where(one_hot, ALPHA, 1.0 - ALPHA)
    pt = jnp.where(one_hot, p, 1.0 - p)
    valid = label != IGNORE_LABEL
    pt = jnp.where(valid, pt, jnp.ones_like(pt))
    beta = (1.0 - pt) ** GAMMA
    t_sum = jnp.sum(jnp.ones_like(pt), axis=(-2, -1), keepdims=True)
    beta_sum = jnp.sum(beta, axis=(-2, -1), keepdims=True)
    mult = t_sum / (beta_sum + EPS)
    beta = beta * mult
    loss = -alpha * beta * jnp.log(jnp.minimum(pt + EPS, 1.0))
    sw = valid.astype(jnp.float32)
    loss = WEIGHT * (loss * sw)
    bsum = jnp.sum(sw, axis=(1, 2, 3))
    loss = jnp.sum(loss, axis=(1, 2, 3)) / (bsum + EPS)
    return SCALE * loss


if __name__ == "__main__":
    key = jax.random.PRNGKey(0)
    k1, k2, k3, k4 = jax.random.split(key, 4)

    # Case 1: module-default small shape. C=4 folds to 8 sublane rows,
    # single 128-lane spatial tile, float32 labels consumed natively.
    B, C, H, W = 2, 4, 16, 16
    pred = jax.random.normal(k1, (B, C, H, W), dtype=jnp.float32)
    label = jax.random.randint(k2, (B, C, H, W), minval=-1, maxval=2).astype(
        jnp.float32)
    out = jax.block_until_ready(normalized_focal_loss_sigmoid(pred, label))
    ref = _reference(pred, label)
    assert out.shape == (B,)
    assert jnp.allclose(out, ref, rtol=1e-5, atol=1e-6), (out, ref)

    # Case 2: multi-tile accumulator path with the sublane fold
    # (C=4 -> 8 rows, 512 lanes -> 4 tiles of 128).
    B2, C2, H2, W2 = 2, 4, 32, 32
    pred2 = jax.random.normal(k3, (B2, C2, H2, W2), dtype=jnp.float32)
    label2 = jax.random.randint(k4, (B2, C2, H2, W2), minval=-1, maxval=2).astype(
        jnp.float32)
    out2 = jax.block_until_ready(
        normalized_focal_loss_sigmoid(pred2, label2, lane_tile=128))
    ref2 = _reference(pred2, label2)
    assert jnp.allclose(out2, ref2, rtol=1e-5, atol=1e-6), (out2, ref2)

    # Case 3: B=1 with int32 labels -> second parallel (megacore) axis P=2,
    # native integer label dtype read directly by the kernel.
    B3, C3, H3, W3 = 1, 8, 32, 32
    pred3 = jax.random.normal(k1, (B3, C3, H3, W3), dtype=jnp.float32)
    label3 = jax.random.randint(k2, (B3, C3, H3, W3), minval=-1, maxval=2)
    out3 = jax.block_until_ready(
        normalized_focal_loss_sigmoid(pred3, label3, lane_tile=128))
    ref3 = _reference(pred3, label3)
    assert out3.shape == (B3,)
    assert jnp.allclose(out3, ref3, rtol=1e-5, atol=1e-6), (out3, ref3)

    print("KERNEL_OK")
</pallas_src>

<mosaic_0001>
module attributes {stable_mosaic.version = 11 : i64} {
  func.func @_nfl_kernel(%arg0: i32, %arg1: i32, %arg2: i32, %arg3: memref<1x8x128xf32, #tpu.memory_space<vmem>>, %arg4: memref<1x8x128xf32, #tpu.memory_space<vmem>>, %arg5: memref<1x8x1xf32, #tpu.memory_space<vmem>>, %arg6: memref<1x8x1xf32, #tpu.memory_space<vmem>>, %arg7: memref<1x8x1xf32, #tpu.memory_space<vmem>>, %arg8: memref<1x8x128xf32, #tpu.memory_space<vmem>>, %arg9: memref<1x8x128xf32, #tpu.memory_space<vmem>>, %arg10: memref<1x8x128xf32, #tpu.memory_space<vmem>>) attributes {dimension_semantics = [#tpu.dimension_semantics<parallel>, #tpu.dimension_semantics<parallel>, #tpu.dimension_semantics<arbitrary>], iteration_bounds = array<i64: 2, 1, 1>, scalar_prefetch = 0 : i64, scratch_operands = 3 : i64, tpu.core_type = #tpu.core_type<tc>, window_params = [{transform_indices = @transform_0, window_bounds = array<i64: 1, 8, 128>}, {transform_indices = @transform_1, window_bounds = array<i64: 1, 8, 128>}, {transform_indices = @transform_2, window_bounds = array<i64: 1, 8, 1>}, {transform_indices = @transform_3, window_bounds = array<i64: 1, 8, 1>}, {transform_indices = @transform_4, window_bounds = array<i64: 1, 8, 1>}]} {
    %c0 = arith.constant 0 : index
    %c0_0 = arith.constant 0 : index
    %c0_1 = arith.constant 0 : index
    %0 = vector.load %arg3[%c0, %c0_0, %c0_1] : memref<1x8x128xf32, #tpu.memory_space<vmem>>, vector<1x8x128xf32>
    %c0_2 = arith.constant 0 : index
    %c0_3 = arith.constant 0 : index
    %c0_4 = arith.constant 0 : index
    %1 = vector.load %arg4[%c0_2, %c0_3, %c0_4] : memref<1x8x128xf32, #tpu.memory_space<vmem>>, vector<1x8x128xf32>
    %cst = arith.constant 0.000000e+00 : f32
    %2 = vector.broadcast %cst : f32 to vector<1x8x128xf32>
    %3 = arith.cmpf ogt, %1, %2 : vector<1x8x128xf32>
    %cst_5 = arith.constant -1.000000e+00 : f32
    %4 = vector.broadcast %cst_5 : f32 to vector<1x8x128xf32>
    %5 = arith.cmpf one, %1, %4 : vector<1x8x128xf32>
    %6 = arith.negf %0 : vector<1x8x128xf32>
    %7 = math.exp %6 : vector<1x8x128xf32>
    %cst_6 = arith.constant 1.000000e+00 : f32
    %8 = vector.broadcast %cst_6 : f32 to vector<1x8x128xf32>
    %9 = arith.addf %8, %7 : vector<1x8x128xf32>
    %10 = arith.divf %8, %9 : vector<1x8x128xf32>
    %cst_7 = arith.constant 1.000000e+00 : f32
    %11 = vector.broadcast %cst_7 : f32 to vector<1x8x128xf32>
    %12 = arith.subf %11, %10 : vector<1x8x128xf32>
    %13 = arith.select %3, %10, %12 : vector<1x8x128xi1>, vector<1x8x128xf32>
    %cst_8 = arith.constant 1.000000e+00 : f32
    %14 = vector.broadcast %cst_8 : f32 to vector<1x8x128xf32>
    %15 = arith.select %5, %13, %14 : vector<1x8x128xi1>, vector<1x8x128xf32>
    %cst_9 = arith.constant 1.000000e+00 : f32
    %16 = vector.broadcast %cst_9 : f32 to vector<1x8x128xf32>
    %17 = arith.subf %16, %15 : vector<1x8x128xf32>
    %18 = arith.mulf %17, %17 : vector<1x8x128xf32>
    %cst_10 = arith.constant -2.500000e-01 : f32
    %cst_11 = arith.constant -7.500000e-01 : f32
    %19 = vector.broadcast %cst_10 : f32 to vector<1x8x128xf32>
    %20 = vector.broadcast %cst_11 : f32 to vector<1x8x128xf32>
    %21 = arith.select %3, %19, %20 : vector<1x8x128xi1>, vector<1x8x128xf32>
    %cst_12 = arith.constant 9.99999996E-13 : f32
    %22 = vector.broadcast %cst_12 : f32 to vector<1x8x128xf32>
    %23 = arith.addf %15, %22 : vector<1x8x128xf32>
    %cst_13 = arith.constant 1.000000e+00 : f32
    %24 = vector.broadcast %cst_13 : f32 to vector<1x8x128xf32>
    %25 = arith.minimumf %23, %24 : vector<1x8x128xf32>
    %26 = math.log %25 : vector<1x8x128xf32>
    %27 = arith.mulf %21, %18 : vector<1x8x128xf32>
    %28 = arith.mulf %27, %26 : vector<1x8x128xf32>
    %29 = arith.extui %5 : vector<1x8x128xi1> to vector<1x8x128xi32>
    %30 = arith.sitofp %29 : vector<1x8x128xi32> to vector<1x8x128xf32>
    %c0_i32 = arith.constant 0 : i32
    %31 = arith.cmpi eq, %arg2, %c0_i32 : i32
    %32 = arith.extui %31 : i1 to i32
    %c0_i32_14 = arith.constant 0 : i32
    %33 = arith.cmpi ne, %32, %c0_i32_14 : i32
    scf.if %33 {
      %c0_19 = arith.constant 0 : index
      %c0_20 = arith.constant 0 : index
      %c0_21 = arith.constant 0 : index
      %40 = vector.load %arg8[%c0_19, %c0_20, %c0_21] : memref<1x8x128xf32, #tpu.memory_space<vmem>>, vector<1x8x128xf32>
      tpu.vector_store %arg8[%c0_19, %c0_20, %c0_21], %18 {strides = array<i32>} : memref<1x8x128xf32, #tpu.memory_space<vmem>>, vector<1x8x128xf32>,
      %c0_22 = arith.constant 0 : index
      %c0_23 = arith.constant 0 : index
      %c0_24 = arith.constant 0 : index
      %41 = vector.load %arg9[%c0_22, %c0_23, %c0_24] : memref<1x8x128xf32, #tpu.memory_space<vmem>>, vector<1x8x128xf32>
      tpu.vector_store %arg9[%c0_22, %c0_23, %c0_24], %28 {strides = array<i32>} : memref<1x8x128xf32, #tpu.memory_space<vmem>>, vector<1x8x128xf32>,
      %c0_25 = arith.constant 0 : index
      %c0_26 = arith.constant 0 : index
      %c0_27 = arith.constant 0 : index
      %42 = vector.load %arg10[%c0_25, %c0_26, %c0_27] : memref<1x8x128xf32, #tpu.memory_space<vmem>>, vector<1x8x128xf32>
      tpu.vector_store %arg10[%c0_25, %c0_26, %c0_27], %30 {strides = array<i32>} : memref<1x8x128xf32, #tpu.memory_space<vmem>>, vector<1x8x128xf32>,
    } else {
    }
    %c0_i32_15 = arith.constant 0 : i32
    %34 = arith.cmpi sgt, %arg2, %c0_i32_15 : i32
    %35 = arith.extui %34 : i1 to i32
    %c0_i32_16 = arith.constant 0 : i32
    %36 = arith.cmpi ne, %35, %c0_i32_16 : i32
    scf.if %36 {
      %c0_19 = arith.constant 0 : index
      %c0_20 = arith.constant 0 : index
      %c0_21 = arith.constant 0 : index
      %40 = vector.load %arg8[%c0_19, %c0_20, %c0_21] : memref<1x8x128xf32, #tpu.memory_space<vmem>>, vector<1x8x128xf32>
      %41 = arith.addf %40, %18 : vector<1x8x128xf32>
      %c0_22 = arith.constant 0 : index
      %c0_23 = arith.constant 0 : index
      %c0_24 = arith.constant 0 : index
      %42 = vector.load %arg8[%c0_22, %c0_23, %c0_24] : memref<1x8x128xf32, #tpu.memory_space<vmem>>, vector<1x8x128xf32>
      tpu.vector_store %arg8[%c0_22, %c0_23, %c0_24], %41 {strides = array<i32>} : memref<1x8x128xf32, #tpu.memory_space<vmem>>, vector<1x8x128xf32>,
      %c0_25 = arith.constant 0 : index
      %c0_26 = arith.constant 0 : index
      %c0_27 = arith.constant 0 : index
      %43 = vector.load %arg9[%c0_25, %c0_26, %c0_27] : memref<1x8x128xf32, #tpu.memory_space<vmem>>, vector<1x8x128xf32>
      %44 = arith.addf %43, %28 : vector<1x8x128xf32>
      %c0_28 = arith.constant 0 : index
      %c0_29 = arith.constant 0 : index
      %c0_30 = arith.constant 0 : index
      %45 = vector.load %arg9[%c0_28, %c0_29, %c0_30] : memref<1x8x128xf32, #tpu.memory_space<vmem>>, vector<1x8x128xf32>
      tpu.vector_store %arg9[%c0_28, %c0_29, %c0_30], %44 {strides = array<i32>} : memref<1x8x128xf32, #tpu.memory_space<vmem>>, vector<1x8x128xf32>,
      %c0_31 = arith.constant 0 : index
      %c0_32 = arith.constant 0 : index
      %c0_33 = arith.constant 0 : index
      %46 = vector.load %arg10[%c0_31, %c0_32, %c0_33] : memref<1x8x128xf32, #tpu.memory_space<vmem>>, vector<1x8x128xf32>
      %47 = arith.addf %46, %30 : vector<1x8x128xf32>
      %c0_34 = arith.constant 0 : index
      %c0_35 = arith.constant 0 : index
      %c0_36 = arith.constant 0 : index
      %48 = vector.load %arg10[%c0_34, %c0_35, %c0_36] : memref<1x8x128xf32, #tpu.memory_space<vmem>>, vector<1x8x128xf32>
      tpu.vector_store %arg10[%c0_34, %c0_35, %c0_36], %47 {strides = array<i32>} : memref<1x8x128xf32, #tpu.memory_space<vmem>>, vector<1x8x128xf32>,
    } else {
    }
    %c0_i32_17 = arith.constant 0 : i32
    %37 = arith.cmpi eq, %arg2, %c0_i32_17 : i32
    %38 = arith.extui %37 : i1 to i32
    %c0_i32_18 = arith.constant 0 : i32
    %39 = arith.cmpi ne, %38, %c0_i32_18 : i32
    scf.if %39 {
      %c0_19 = arith.constant 0 : index
      %c0_20 = arith.constant 0 : index
      %c0_21 = arith.constant 0 : index
      %40 = vector.load %arg8[%c0_19, %c0_20, %c0_21] : memref<1x8x128xf32, #tpu.memory_space<vmem>>, vector<1x8x128xf32>
      %cst_22 = arith.constant dense<0.000000e+00> : vector<1x8xf32>
      %41 = vector.multi_reduction <add>, %40, %cst_22 [2] : vector<1x8x128xf32> to vector<1x8xf32>
      %42 = vector.shape_cast %41 : vector<1x8xf32> to vector<1x8x1xf32>
      %c0_23 = arith.constant 0 : index
      %c0_24 = arith.constant 0 : index
      %c0_25 = arith.constant 0 : index
      %43 = vector.load %arg5[%c0_23, %c0_24, %c0_25] : memref<1x8x1xf32, #tpu.memory_space<vmem>>, vector<1x8x1xf32>
      tpu.vector_store %arg5[%c0_23, %c0_24, %c0_25], %42 {strides = array<i32>} : memref<1x8x1xf32, #tpu.memory_space<vmem>>, vector<1x8x1xf32>,
      %c0_26 = arith.constant 0 : index
      %c0_27 = arith.constant 0 : index
      %c0_28 = arith.constant 0 : index
      %44 = vector.load %arg9[%c0_26, %c0_27, %c0_28] : memref<1x8x128xf32, #tpu.memory_space<vmem>>, vector<1x8x128xf32>
      %cst_29 = arith.constant dense<0.000000e+00> : vector<1x8xf32>
      %45 = vector.multi_reduction <add>, %44, %cst_29 [2] : vector<1x8x128xf32> to vector<1x8xf32>
      %46 = vector.shape_cast %45 : vector<1x8xf32> to vector<1x8x1xf32>
      %c0_30 = arith.constant 0 : index
      %c0_31 = arith.constant 0 : index
      %c0_32 = arith.constant 0 : index
      %47 = vector.load %arg6[%c0_30, %c0_31, %c0_32] : memref<1x8x1xf32, #tpu.memory_space<vmem>>, vector<1x8x1xf32>
      tpu.vector_store %arg6[%c0_30, %c0_31, %c0_32], %46 {strides = array<i32>} : memref<1x8x1xf32, #tpu.memory_space<vmem>>, vector<1x8x1xf32>,
      %c0_33 = arith.constant 0 : index
      %c0_34 = arith.constant 0 : index
      %c0_35 = arith.constant 0 : index
      %48 = vector.load %arg10[%c0_33, %c0_34, %c0_35] : memref<1x8x128xf32, #tpu.memory_space<vmem>>, vector<1x8x128xf32>
      %cst_36 = arith.constant dense<0.000000e+00> : vector<1x8xf32>
      %49 = vector.multi_reduction <add>, %48, %cst_36 [2] : vector<1x8x128xf32> to vector<1x8xf32>
      %50 = vector.shape_cast %49 : vector<1x8xf32> to vector<1x8x1xf32>
      %c0_37 = arith.constant 0 : index
      %c0_38 = arith.constant 0 : index
      %c0_39 = arith.constant 0 : index
      %51 = vector.load %arg7[%c0_37, %c0_38, %c0_39] : memref<1x8x1xf32, #tpu.memory_space<vmem>>, vector<1x8x1xf32>
      tpu.vector_store %arg7[%c0_37, %c0_38, %c0_39], %50 {strides = array<i32>} : memref<1x8x1xf32, #tpu.memory_space<vmem>>, vector<1x8x1xf32>,
    } else {
    }
    return
  }
  func.func @transform_0(%arg0: i32, %arg1: i32, %arg2: i32) -> (i32, i32, i32) {
    %c1_i32 = arith.constant 1 : i32
    %0 = arith.muli %arg1, %c1_i32 : i32
    %1 = arith.addi %0, %arg2 : i32
    %c0_i32 = arith.constant 0 : i32
    %c0_i32_0 = arith.constant 0 : i32
    return %arg0, %c0_i32, %1 : i32, i32, i32
  }
  func.func @transform_1(%arg0: i32, %arg1: i32, %arg2: i32) -> (i32, i32, i32) {
    %c1_i32 = arith.constant 1 : i32
    %0 = arith.muli %arg1, %c1_i32 : i32
    %1 = arith.addi %0, %arg2 : i32
    %c0_i32 = arith.constant 0 : i32
    %c0_i32_0 = arith.constant 0 : i32
    return %arg0, %c0_i32, %1 : i32, i32, i32
  }
  func.func @transform_2(%arg0: i32, %arg1: i32, %arg2: i32) -> (i32, i32, i32) {
    %c1_i32 = arith.constant 1 : i32
    %0 = arith.muli %arg0, %c1_i32 : i32
    %1 = arith.addi %0, %arg1 : i32
    %c0_i32 = arith.constant 0 : i32
    %c0_i32_0 = arith.constant 0 : i32
    %c0_i32_1 = arith.constant 0 : i32
    return %1, %c0_i32, %c0_i32_0 : i32, i32, i32
  }
  func.func @transform_3(%arg0: i32, %arg1: i32, %arg2: i32) -> (i32, i32, i32) {
    %c1_i32 = arith.constant 1 : i32
    %0 = arith.muli %arg0, %c1_i32 : i32
    %1 = arith.addi %0, %arg1 : i32
    %c0_i32 = arith.constant 0 : i32
    %c0_i32_0 = arith.constant 0 : i32
    %c0_i32_1 = arith.constant 0 : i32
    return %1, %c0_i32, %c0_i32_0 : i32, i32, i32
  }
  func.func @transform_4(%arg0: i32, %arg1: i32, %arg2: i32) -> (i32, i32, i32) {
    %c1_i32 = arith.constant 1 : i32
    %0 = arith.muli %arg0, %c1_i32 : i32
    %1 = arith.addi %0, %arg1 : i32
    %c0_i32 = arith.constant 0 : i32
    %c0_i32_0 = arith.constant 0 : i32
    %c0_i32_1 = arith.constant 0 : i32
    return %1, %c0_i32, %c0_i32_0 : i32, i32, i32
  }
}

</mosaic_0001>

<llo_original>
// kernel: normalized_focal_loss_sigmoid.1
$region0: #{normalized_focal_loss_sigmoid.1}
  #allocation0 [shape = 'u32[]', space=smem, size = 0x4, offset = 0x4, fixed_abs, tag = 'smem constant byte address 0x4 - core index']
  #allocation1 [shape = 'u32[144,128]{1,0:T(1,128)}', space=vmem, size = 0x12000, scoped, tag = 'internal scratch']
  #allocation2 [shape = 'f32[1,8,128]{2,1,0:T(8,128)}', space=vmem, size = 0x1000, scoped, tag = 'scratch operand']
  #allocation3 [shape = 'f32[1,8,128]{2,1,0:T(8,128)}', space=vmem, size = 0x1000, scoped, tag = 'scratch operand']
  #allocation4 [shape = 'f32[1,8,128]{2,1,0:T(8,128)}', space=vmem, size = 0x1000, scoped, tag = 'scratch operand']
  %s0 = inlined_call_operand.vmem [shape: f32[2,8,128], index: 0, kind: input, shape index: {}]
  %s1 = inlined_call_operand.vmem [shape: f32[2,8,128], index: 1, kind: input, shape index: {}]
  %s2 = inlined_call_operand.vmem [shape: f32[2,8,1], index: 2, kind: output, shape index: {0}]
  %s3 = inlined_call_operand.vmem [shape: f32[2,8,1], index: 3, kind: output, shape index: {1}]
  %s4 = inlined_call_operand.vmem [shape: f32[2,8,1], index: 4, kind: output, shape index: {2}]
  %5 = xla_tuple %s2, %s3, %s4
  %s6 = sld [smem:[#allocation0]]
  $region69: #{normalized_focal_loss_sigmoid.1} parent=0
    _
  %s8 = ssub.s32 1, %s6
  %s9 = scalar_select 0, %s8, %s6
  loop: start=0, step=1, limit=4
  $region2: #{normalized_focal_loss_sigmoid.1} parent=0 // loop_pre_header
    _
  $region3: #{normalized_focal_loss_sigmoid.1} parent=0 // loop_header
    %s11 = sphi 0, %s15
    %p12 = scmp.ge.s32.totalorder %s11, 4
    %s18 = sphi 0, %s37
    %s19 = sphi 0, %s33
    %s20 = sphi 0, %s29
    %s21 = sphi 0, %s18
    %s22 = sphi 0, %s19
    %s23 = sphi 0, %s20
    %s24 = sphi 0, %s21
    %s25 = sphi 0, %s22
    %s26 = sphi 0, %s23
    %s44 = sphi 0, %s46
    %s47 = sphi 0, %s44
    %s48 = sphi 0, %s47
    %s64 = sphi 0, %s48
    %s74 = sphi 0, %s76
    %s77 = sphi 0, %s74
    %s78 = sphi 0, %s77
    %s94 = sphi 0, %s78
    %s102 = sphi 0, %s104
    %s105 = sphi 0, %s102
    %s106 = sphi 0, %s105
    %s122 = sphi 0, %s106
    %s130 = sphi 0, %s132
    %s133 = sphi 0, %s130
    %s134 = sphi 0, %s133
    %s150 = sphi 0, %s134
    %s158 = sphi 0, %s160
    %s161 = sphi 0, %s158
    %s162 = sphi 0, %s161
    %s178 = sphi 0, %s162
  $region4: #{normalized_focal_loss_sigmoid.1} parent=0 // loop_header_branch
    %14 = sbr.rel (%p12) target = $region8
  $region5: #{normalized_focal_loss_sigmoid.1} parent=0 // loop_body
    %s16 = ssub.s32 %s11, 1
    %s17 = ssub.s32 %s11, 2
    %s27 = sadd.s32 1, %s20
    %p28 = scmp.ge.s32.totalorder %s27, 1
    %s29 = scalar_select %p28, 0, %s27
    %s30 = sadd.s32 1, %s19
    %s31 = scalar_select %p28, %s30, %s19
    %p32 = scmp.ge.s32.totalorder %s31, 1
    %s33 = scalar_select %p32, 0, %s31
    %s34 = sadd.s32 1, %s18
    %s35 = scalar_select %p32, %s34, %s18
    %p36 = scmp.ge.s32.totalorder %s35, 2
    %s37 = scalar_select %p36, 0, %s35
    %s38 = sadd.s32 %s19, %s20
    %s39 = sadd.s32 %s33, %s29
    %s40 = ssub.s32 %s18, %s37
    %s41 = ssub.s32 %s38, %s39
    %s42 = sor.u32 %s40, %s41
    %p43 = scmp.eq.s32.totalorder %s42, 0
    %s45 = sadd.s32 %s44, 1
    %s46 = scalar_select %p43, %s44, %s45
    %p49 = pneg %p43
    %p50 = scmp.eq.s32.totalorder %s11, 1
    %p51 = por %p49, %p50
    %p52 = scmp.ne.s32.totalorder %s44, %s47
    %p53 = scmp.eq.s32.totalorder %s11, 0
    %p54 = por %p52, %p53
    %p55 = scmp.ne.s32.totalorder %s44, %s47
    %p56 = scmp.eq.s32.totalorder %s16, 1
    %p57 = por %p55, %p56
    %p58 = scmp.ne.s32.totalorder %s47, %s48
    %p59 = scmp.eq.s32.totalorder %s16, 0
    %p60 = por %p58, %p59
    %p61 = scmp.ne.s32.totalorder %s47, %s48
    %p62 = scmp.eq.s32.totalorder %s17, 1
    %p63 = por %p61, %p62
    %p65 = scmp.ne.s32.totalorder %s48, %s64
    %p66 = scmp.eq.s32.totalorder %s17, 0
    %p67 = por %p65, %p66
    %s68 = sadd.s32 %s19, %s20
    %s69 = sadd.s32 %s33, %s29
    %s70 = ssub.s32 %s18, %s37
    %s71 = ssub.s32 %s68, %s69
    %s72 = sor.u32 %s70, %s71
    %p73 = scmp.eq.s32.totalorder %s72, 0
    %s75 = sadd.s32 %s74, 1
    %s76 = scalar_select %p73, %s74, %s75
    %p79 = pneg %p73
    %p80 = scmp.eq.s32.totalorder %s11, 1
    %p81 = por %p79, %p80
    %p82 = scmp.ne.s32.totalorder %s74, %s77
    %p83 = scmp.eq.s32.totalorder %s11, 0
    %p84 = por %p82, %p83
    %p85 = scmp.ne.s32.totalorder %s74, %s77
    %p86 = scmp.eq.s32.totalorder %s16, 1
    %p87 = por %p85, %p86
    %p88 = scmp.ne.s32.totalorder %s77, %s78
    %p89 = scmp.eq.s32.totalorder %s16, 0
    %p90 = por %p88, %p89
    %p91 = scmp.ne.s32.totalorder %s77, %s78
    %p92 = scmp.eq.s32.totalorder %s17, 1
    %p93 = por %p91, %p92
    %p95 = scmp.ne.s32.totalorder %s78, %s94
    %p96 = scmp.eq.s32.totalorder %s17, 0
    %p97 = por %p95, %p96
    %s98 = sadd.s32 %s18, %s19
    %s99 = sadd.s32 %s37, %s33
    %s100 = ssub.s32 %s98, %s99
    %p101 = scmp.eq.s32.totalorder %s100, 0
    %s103 = sadd.s32 %s102, 1
    %s104 = scalar_select %p101, %s102, %s103
    %p107 = pneg %p101
    %p108 = scmp.eq.s32.totalorder %s11, 1
    %p109 = por %p107, %p108
    %p110 = scmp.ne.s32.totalorder %s102, %s105
    %p111 = scmp.eq.s32.totalorder %s11, 0
    %p112 = por %p110, %p111
    %p113 = scmp.ne.s32.totalorder %s102, %s105
    %p114 = scmp.eq.s32.totalorder %s16, 1
    %p115 = por %p113, %p114
    %p116 = scmp.ne.s32.totalorder %s105, %s106
    %p117 = scmp.eq.s32.totalorder %s16, 0
    %p118 = por %p116, %p117
    %p119 = scmp.ne.s32.totalorder %s105, %s106
    %p120 = scmp.eq.s32.totalorder %s17, 1
    %p121 = por %p119, %p120
    %p123 = scmp.ne.s32.totalorder %s106, %s122
    %p124 = scmp.eq.s32.totalorder %s17, 0
    %p125 = por %p123, %p124
    %s126 = sadd.s32 %s18, %s19
    %s127 = sadd.s32 %s37, %s33
    %s128 = ssub.s32 %s126, %s127
    %p129 = scmp.eq.s32.totalorder %s128, 0
    %s131 = sadd.s32 %s130, 1
    %s132 = scalar_select %p129, %s130, %s131
    %p135 = pneg %p129
    %p136 = scmp.eq.s32.totalorder %s11, 1
    %p137 = por %p135, %p136
    %p138 = scmp.ne.s32.totalorder %s130, %s133
    %p139 = scmp.eq.s32.totalorder %s11, 0
    %p140 = por %p138, %p139
    %p141 = scmp.ne.s32.totalorder %s130, %s133
    %p142 = scmp.eq.s32.totalorder %s16, 1
    %p143 = por %p141, %p142
    %p144 = scmp.ne.s32.totalorder %s133, %s134
    %p145 = scmp.eq.s32.totalorder %s16, 0
    %p146 = por %p144, %p145
    %p147 = scmp.ne.s32.totalorder %s133, %s134
    %p148 = scmp.eq.s32.totalorder %s17, 1
    %p149 = por %p147, %p148
    %p151 = scmp.ne.s32.totalorder %s134, %s150
    %p152 = scmp.eq.s32.totalorder %s17, 0
    %p153 = por %p151, %p152
    %s154 = sadd.s32 %s18, %s19
    %s155 = sadd.s32 %s37, %s33
    %s156 = ssub.s32 %s154, %s155
    %p157 = scmp.eq.s32.totalorder %s156, 0
    %s159 = sadd.s32 %s158, 1
    %s160 = scalar_select %p157, %s158, %s159
    %p163 = pneg %p157
    %p164 = scmp.eq.s32.totalorder %s11, 1
    %p165 = por %p163, %p164
    %p166 = scmp.ne.s32.totalorder %s158, %s161
    %p167 = scmp.eq.s32.totalorder %s11, 0
    %p168 = por %p166, %p167
    %p169 = scmp.ne.s32.totalorder %s158, %s161
    %p170 = scmp.eq.s32.totalorder %s16, 1
    %p171 = por %p169, %p170
    %p172 = scmp.ne.s32.totalorder %s161, %s162
    %p173 = scmp.eq.s32.totalorder %s16, 0
    %p174 = por %p172, %p173
    %p175 = scmp.ne.s32.totalorder %s161, %s162
    %p176 = scmp.eq.s32.totalorder %s17, 1
    %p177 = por %p175, %p176
    %p179 = scmp.ne.s32.totalorder %s162, %s178
    %p180 = scmp.eq.s32.totalorder %s17, 0
    %p181 = por %p179, %p180
    %p182 = scmp.le.s32.totalorder 1, %s11
    %p183 = scmp.lt.s32.totalorder %s11, 3
    %p184 = pnand %p182, %p183
    %p185 = pneg %p184
    // Predicated region
    $region9: #{normalized_focal_loss_sigmoid.1} parent=5 // pred_check
      _
    $region10: #{normalized_focal_loss_sigmoid.1} parent=5 // pred_check_branch
      %187 = sbr.rel (%p184) target = $region12
    $region11: #{normalized_focal_loss_sigmoid.1} parent=5 // pred_region
      %s188 = ssub.s32 %s11, 1
    $region12: #{normalized_focal_loss_sigmoid.1} parent=5 // pred_fallthru
      _
    %p189 = scmp.lt.s32.totalorder %s11, 2
    // Predicated region
    $region13: #{normalized_focal_loss_sigmoid.1} parent=5 // pred_check
      %p190 = pneg %p189
    $region14: #{normalized_focal_loss_sigmoid.1} parent=5 // pred_check_branch
      %192 = sbr.rel (%p190) target = $region16
    $region15: #{normalized_focal_loss_sigmoid.1} parent=5 // pred_region
      // Predicated region
      $region17: #{normalized_focal_loss_sigmoid.1} parent=15 // pred_check
        %p193 = pneg %p54
      $region18: #{normalized_focal_loss_sigmoid.1} parent=15 // pred_check_branch
        %195 = sbr.rel (%p193) target = $region20
      $region19: #{normalized_focal_loss_sigmoid.1} parent=15 // pred_region
        %s196 = sadd.s32 %s19, %s20
        %p197 = scmp.lt.s32.totalorder %s18, 1
        %s198 = scalar_select %p197, %s18, 1
        %p199 = scmp.lt.s32.totalorder %s196, 0
        %s200 = scalar_select %p199, %s196, 0
        %s201 = sadd.s32 %s200, %s198
        %s202 = smul.addr %s201, 8
        %s203 = scalar_lea.vmem %s0, %s202
        %s204 = sadd.s32 %s19, %s20
      $region20: #{normalized_focal_loss_sigmoid.1} parent=15 // pred_fallthru
        _
      // Predicated region
      $region21: #{normalized_focal_loss_sigmoid.1} parent=15 // pred_check
        %p205 = pneg %p84
      $region22: #{normalized_focal_loss_sigmoid.1} parent=15 // pred_check_branch
        %207 = sbr.rel (%p205) target = $region24
      $region23: #{normalized_focal_loss_sigmoid.1} parent=15 // pred_region
        %s208 = sadd.s32 %s19, %s20
        %p209 = scmp.lt.s32.totalorder %s18, 1
        %s210 = scalar_select %p209, %s18, 1
        %p211 = scmp.lt.s32.totalorder %s208, 0
        %s212 = scalar_select %p211, %s208, 0
        %s213 = sadd.s32 %s212, %s210
        %s214 = smul.addr %s213, 8
        %s215 = scalar_lea.vmem %s1, %s214
        %s216 = sadd.s32 %s19, %s20
      $region24: #{normalized_focal_loss_sigmoid.1} parent=15 // pred_fallthru
        _
    $region16: #{normalized_focal_loss_sigmoid.1} parent=5 // pred_fallthru
      _
    %p217 = scmp.le.s32.totalorder 1, %s11
    %p218 = scmp.lt.s32.totalorder %s11, 3
    %p219 = pnand %p217, %p218
    %p220 = pneg %p219
    // Predicated region
    $region25: #{normalized_focal_loss_sigmoid.1} parent=5 // pred_check
      _
    $region26: #{normalized_focal_loss_sigmoid.1} parent=5 // pred_check_branch
      %222 = sbr.rel (%p219) target = $region28
    $region27: #{normalized_focal_loss_sigmoid.1} parent=5 // pred_region
      %s223 = ssub.s32 %s11, 1
      %s224 = sadd.s32 %s22, %s23
      %p225 = scmp.lt.s32.totalorder %s21, 1
      %s226 = scalar_select %p225, %s21, 1
      %p227 = scmp.lt.s32.totalorder %s224, 0
      %s228 = scalar_select %p227, %s224, 0
      %s229 = sadd.s32 %s228, %s226
      %s230 = smul.addr %s229, 8
      %s231 = scalar_lea.vmem %s0, %s230
      %p232 = pneg %p60
      %p233 = pneg %p57
      %s234 = sadd.s32 %s22, %s23
      %p235 = scmp.lt.s32.totalorder %s21, 1
      %s236 = scalar_select %p235, %s21, 1
      %p237 = scmp.lt.s32.totalorder %s234, 0
      %s238 = scalar_select %p237, %s234, 0
      %s239 = sadd.s32 %s238, %s236
      %s240 = smul.addr %s239, 8
      %s241 = scalar_lea.vmem %s1, %s240
      %p242 = pneg %p90
      %p243 = pneg %p87
      %p244 = pneg %p118
      %p245 = pneg %p115
      %s246 = sadd.s32 %s21, %s22
      %p247 = scmp.lt.s32.totalorder %s246, 1
      %s248 = scalar_select %p247, %s246, 1
      %s249 = smul.addr %s248, 8
      %s250 = scalar_lea.vmem %s2, %s249
      %p251 = pneg %p146
      %p252 = pneg %p143
      %s253 = sadd.s32 %s21, %s22
      %p254 = scmp.lt.s32.totalorder %s253, 1
      %s255 = scalar_select %p254, %s253, 1
      %s256 = smul.addr %s255, 8
      %s257 = scalar_lea.vmem %s3, %s256
      %p258 = pneg %p174
      %p259 = pneg %p171
      %s260 = sadd.s32 %s21, %s22
      %p261 = scmp.lt.s32.totalorder %s260, 1
      %s262 = scalar_select %p261, %s260, 1
      %s263 = smul.addr %s262, 8
      %s264 = scalar_lea.vmem %s4, %s263
      %s265 = sadd.s32 %s22, %s23
      %p266 = scmp.lt.s32.totalorder %s21, 1
      %s267 = scalar_select %p266, %s21, 1
      %p268 = scmp.lt.s32.totalorder %s265, 0
      %s269 = scalar_select %p268, %s265, 0
      %s270 = sadd.s32 %s269, %s267
      %s271 = smul.addr %s270, 8
      %s272 = scalar_lea.vmem %s0, %s271
      %s273 = sadd.s32 %s22, %s23
      %s274 = sadd.s32 %s22, %s23
      %p275 = scmp.lt.s32.totalorder %s21, 1
      %s276 = scalar_select %p275, %s21, 1
      %p277 = scmp.lt.s32.totalorder %s274, 0
      %s278 = scalar_select %p277, %s274, 0
      %s279 = sadd.s32 %s278, %s276
      %s280 = smul.addr %s279, 8
      %s281 = scalar_lea.vmem %s1, %s280
      %s282 = sadd.s32 %s22, %s23
      %s283 = sadd.s32 %s21, %s22
      %p284 = scmp.lt.s32.totalorder %s283, 1
      %s285 = scalar_select %p284, %s283, 1
      %s286 = smul.addr %s285, 8
      %s287 = scalar_lea.vmem %s2, %s286
      %s288 = sadd.s32 %s21, %s22
      %s289 = sadd.s32 %s21, %s22
      %p290 = scmp.lt.s32.totalorder %s289, 1
      %s291 = scalar_select %p290, %s289, 1
      %s292 = smul.addr %s291, 8
      %s293 = scalar_lea.vmem %s3, %s292
      %s294 = sadd.s32 %s21, %s22
      %s295 = sadd.s32 %s21, %s22
      %p296 = scmp.lt.s32.totalorder %s295, 1
      %s297 = scalar_select %p296, %s295, 1
      %s298 = smul.addr %s297, 8
      %s299 = scalar_lea.vmem %s4, %s298
      %s300 = sadd.s32 %s21, %s22
      %v301 = vld [vmem:[%s272] sm:$0xff]
      %v302 = vld [vmem:[%s281] sm:$0xff]
      %vm303 = vcmp.gt.f32.partialorder %v302, 0.0
      %vm304 = vcmp.ne.f32.partialorder %v302, -1.0
      %v305 = vxor.u32 %v301, 2147483648
      %v306 = vmul.f32 %v305, 1.442695
      %v307 = vpow.pop %v306
      %v308 = vadd.f32 %v307, 1.0
      %v309 = vrcp.pop %v308
      %v310 = vmul.f32 1.0, %v309
      %v311 = vsub.f32 1.0, %v310
      %v312 = vsel %vm303, %v310, %v311
      %v313 = vsel %vm304, %v312, 1.0
      %v314 = vsub.f32 1.0, %v313
      %v315 = vmul.f32 %v314, %v314
      %v316 = vsel %vm303, -0.25, -0.75
      %v317 = vadd.f32 %v313, 1e-12
      %v318 = vmin.f32 %v317, 1.0
      %v319 = vlog2.pop %v318
      %v320 = vmul.f32 %v319, 0.6931472
      %v321 = vmul.f32 %v316, %v315
      %v322 = vmul.f32 %v321, %v320
      %v323 = vsel %vm304, 1, 0
      %v324 = vcvt.s32.f32 %v323
      %p325 = scmp.eq.s32.totalorder %s23, 0
      // Predicated region
      $region29: #{normalized_focal_loss_sigmoid.1} parent=27 // pred_check
        %p326 = pneg %p325
      $region30: #{normalized_focal_loss_sigmoid.1} parent=27 // pred_check_branch
        %328 = sbr.rel (%p326) target = $region32
      $region31: #{normalized_focal_loss_sigmoid.1} parent=27 // pred_region
        %329 = vst [vmem:[#allocation2] sm:$0xff] %v315
        %330 = vst [vmem:[#allocation3] sm:$0xff] %v322
        %331 = vst [vmem:[#allocation4] sm:$0xff] %v324
      $region32: #{normalized_focal_loss_sigmoid.1} parent=27 // pred_fallthru
        _
      %p332 = scmp.gt.s32.totalorder %s23, 0
      // Predicated region
      $region33: #{normalized_focal_loss_sigmoid.1} parent=27 // pred_check
        %p333 = pneg %p332
      $region34: #{normalized_focal_loss_sigmoid.1} parent=27 // pred_check_branch
        %335 = sbr.rel (%p333) target = $region36
      $region35: #{normalized_focal_loss_sigmoid.1} parent=27 // pred_region
        %v336 = vld [vmem:[#allocation2] sm:$0xff]
        %v337 = vadd.f32 %v336, %v315
        %338 = vst [vmem:[#allocation2] sm:$0xff] %v337
        %v339 = vld [vmem:[#allocation3] sm:$0xff]
        %v340 = vadd.f32 %v339, %v322
        %341 = vst [vmem:[#allocation3] sm:$0xff] %v340
        %v342 = vld [vmem:[#allocation4] sm:$0xff]
        %v343 = vadd.f32 %v342, %v324
        %344 = vst [vmem:[#allocation4] sm:$0xff] %v343
      $region36: #{normalized_focal_loss_sigmoid.1} parent=27 // pred_fallthru
        _
      // Predicated region
      $region37: #{normalized_focal_loss_sigmoid.1} parent=27 // pred_check
        %p345 = pneg %p325
      $region38: #{normalized_focal_loss_sigmoid.1} parent=27 // pred_check_branch
        %347 = sbr.rel (%p345) target = $region40
      $region39: #{normalized_focal_loss_sigmoid.1} parent=27 // pred_region
        %v348 = vld [vmem:[#allocation2] sm:$0xff]
        %349 = vadd.xlane.f32.xlu0 %v348
        %v350 = vpop.xlane.xlu0 %349
        %vm351 = vcmask 7168
        %352 = vst.msk [vmem:[%s287] sm:$0xff] %vm351, %v350
        %v353 = vld [vmem:[#allocation3] sm:$0xff]
        %354 = vadd.xlane.f32.xlu0 %v353
        %v355 = vpop.xlane.xlu0 %354
        %356 = vst.msk [vmem:[%s293] sm:$0xff] %vm351, %v355
        %v357 = vld [vmem:[#allocation4] sm:$0xff]
        %358 = vadd.xlane.f32.xlu0 %v357
        %v359 = vpop.xlane.xlu0 %358
        %360 = vst.msk [vmem:[%s299] sm:$0xff] %vm351, %v359
      $region40: #{normalized_focal_loss_sigmoid.1} parent=27 // pred_fallthru
        _
      %s361 = sadd.s32 %s21, %s22
      %p362 = scmp.lt.s32.totalorder %s361, 1
      %s363 = scalar_select %p362, %s361, 1
      %s364 = smul.addr %s363, 8
      %s365 = scalar_lea.vmem %s2, %s364
      %s366 = sadd.s32 %s21, %s22
      %p367 = scmp.lt.s32.totalorder %s366, 1
      %s368 = scalar_select %p367, %s366, 1
      %s369 = smul.addr %s368, 8
      %s370 = scalar_lea.vmem %s3, %s369
      %s371 = sadd.s32 %s21, %s22
      %p372 = scmp.lt.s32.totalorder %s371, 1
      %s373 = scalar_select %p372, %s371, 1
      %s374 = smul.addr %s373, 8
      %s375 = scalar_lea.vmem %s4, %s374
      // Predicated region
      $region41: #{normalized_focal_loss_sigmoid.1} parent=27 // pred_check
        %p376 = pneg %p115
      $region42: #{normalized_focal_loss_sigmoid.1} parent=27 // pred_check_branch
        %378 = sbr.rel (%p376) target = $region44
      $region43: #{normalized_focal_loss_sigmoid.1} parent=27 // pred_region
        %s379 = sadd.s32 %s21, %s22
      $region44: #{normalized_focal_loss_sigmoid.1} parent=27 // pred_fallthru
        _
      // Predicated region
      $region45: #{normalized_focal_loss_sigmoid.1} parent=27 // pred_check
        %p380 = pneg %p143
      $region46: #{normalized_focal_loss_sigmoid.1} parent=27 // pred_check_branch
        %382 = sbr.rel (%p380) target = $region48
      $region47: #{normalized_focal_loss_sigmoid.1} parent=27 // pred_region
        %s383 = sadd.s32 %s21, %s22
      $region48: #{normalized_focal_loss_sigmoid.1} parent=27 // pred_fallthru
        _
      // Predicated region
      $region49: #{normalized_focal_loss_sigmoid.1} parent=27 // pred_check
        %p384 = pneg %p171
      $region50: #{normalized_focal_loss_sigmoid.1} parent=27 // pred_check_branch
        %386 = sbr.rel (%p384) target = $region52
      $region51: #{normalized_focal_loss_sigmoid.1} parent=27 // pred_region
        %s387 = sadd.s32 %s21, %s22
      $region52: #{normalized_focal_loss_sigmoid.1} parent=27 // pred_fallthru
        _
    $region28: #{normalized_focal_loss_sigmoid.1} parent=5 // pred_fallthru
      _
    %p388 = scmp.le.s32.totalorder 2, %s11
    // Predicated region
    $region53: #{normalized_focal_loss_sigmoid.1} parent=5 // pred_check
      %p389 = pneg %p388
    $region54: #{normalized_focal_loss_sigmoid.1} parent=5 // pred_check_branch
      %391 = sbr.rel (%p389) target = $region56
    $region55: #{normalized_focal_loss_sigmoid.1} parent=5 // pred_region
      %s392 = ssub.s32 %s11, 2
      // Predicated region
      $region57: #{normalized_focal_loss_sigmoid.1} parent=55 // pred_check
        %p393 = pneg %p121
      $region58: #{normalized_focal_loss_sigmoid.1} parent=55 // pred_check_branch
        %395 = sbr.rel (%p393) target = $region60
      $region59: #{normalized_focal_loss_sigmoid.1} parent=55 // pred_region
        %s396 = sadd.s32 %s24, %s25
        %p397 = scmp.lt.s32.totalorder %s396, 1
        %s398 = scalar_select %p397, %s396, 1
        %s399 = smul.addr %s398, 8
        %s400 = scalar_lea.vmem %s2, %s399
      $region60: #{normalized_focal_loss_sigmoid.1} parent=55 // pred_fallthru
        _
      // Predicated region
      $region61: #{normalized_focal_loss_sigmoid.1} parent=55 // pred_check
        %p401 = pneg %p149
      $region62: #{normalized_focal_loss_sigmoid.1} parent=55 // pred_check_branch
        %403 = sbr.rel (%p401) target = $region64
      $region63: #{normalized_focal_loss_sigmoid.1} parent=55 // pred_region
        %s404 = sadd.s32 %s24, %s25
        %p405 = scmp.lt.s32.totalorder %s404, 1
        %s406 = scalar_select %p405, %s404, 1
        %s407 = smul.addr %s406, 8
        %s408 = scalar_lea.vmem %s3, %s407
      $region64: #{normalized_focal_loss_sigmoid.1} parent=55 // pred_fallthru
        _
      // Predicated region
      $region65: #{normalized_focal_loss_sigmoid.1} parent=55 // pred_check
        %p409 = pneg %p177
      $region66: #{normalized_focal_loss_sigmoid.1} parent=55 // pred_check_branch
        %411 = sbr.rel (%p409) target = $region68
      $region67: #{normalized_focal_loss_sigmoid.1} parent=55 // pred_region
        %s412 = sadd.s32 %s24, %s25
        %p413 = scmp.lt.s32.totalorder %s412, 1
        %s414 = scalar_select %p413, %s412, 1
        %s415 = smul.addr %s414, 8
        %s416 = scalar_lea.vmem %s4, %s415
      $region68: #{normalized_focal_loss_sigmoid.1} parent=55 // pred_fallthru
        _
    $region56: #{normalized_focal_loss_sigmoid.1} parent=5 // pred_fallthru
      _
  $region6: #{normalized_focal_loss_sigmoid.1} parent=0 // loop_footer
    %s15 = sadd.s32 1, %s11
  $region7: #{normalized_focal_loss_sigmoid.1} parent=0 // loop_footer_branch
    %10 = sbr.rel target = $region3
  $region8: #{normalized_focal_loss_sigmoid.1} parent=0 // loop_exit
    _

</llo_original>
